<compile_context>
chip_gen: v7x
topology: tpu7x:2x2x1
jax: 0.10.0
libtpu: 0.0.40
codegen_flags: <defaults>
</compile_context>

<pallas_src>
import jax
import jax.numpy as jnp
from jax.experimental import pallas as pl
from jax.experimental.pallas import tpu as pltpu


# --------------------------------------------------------------------------
# Kernel: one batch tile -> two independent fused matmuls (+ bias).
# --------------------------------------------------------------------------
def bidir_kernel(seq_ref, img_ref, w_s2i_ref, b_s2i_ref, w_i2s_ref, b_i2s_ref,
                 attn_seq_ref, attn_img_ref):
    # seq_ref:      (TB, dim_seq)   activation tile (any float dtype)
    # img_ref:      (TB, dim_img)
    # w_s2i_ref:    (dim_img, dim_seq)  fused (out_proj o v_proj), bf16, resident
    # b_s2i_ref:    (1, dim_seq)        fused bias, f32, resident
    # w_i2s_ref:    (dim_seq, dim_img)
    # b_i2s_ref:    (1, dim_img)
    # attn_seq_ref: (TB, dim_seq)
    # attn_img_ref: (TB, dim_img)
    cdt = w_s2i_ref.dtype  # compute dtype of the MXU operands (bf16)

    attn_seq_ref[...] = (
        jnp.dot(img_ref[...].astype(cdt), w_s2i_ref[...],
                preferred_element_type=jnp.float32)
        + b_s2i_ref[...]
    ).astype(attn_seq_ref.dtype)

    attn_img_ref[...] = (
        jnp.dot(seq_ref[...].astype(cdt), w_i2s_ref[...],
                preferred_element_type=jnp.float32)
        + b_i2s_ref[...]
    ).astype(attn_img_ref.dtype)


# --------------------------------------------------------------------------
# One-time parameter fusion (outside the hot path).
# --------------------------------------------------------------------------
def make_fused_params(params_s2i, params_i2s, param_dtype=jnp.bfloat16):
    """Fold v_proj + out_proj of each MHA direction into one weight + bias.

    Fusion is done in f32; the fused weight is cast once to `param_dtype`
    (biases stay f32 -- they are added after the f32 accumulation).

    Returns (w_s2i, b_s2i, w_i2s, b_i2s):
      w_s2i: (dim_img, dim_seq),  b_s2i: (1, dim_seq)
      w_i2s: (dim_seq, dim_img),  b_i2s: (1, dim_img)
    """
    def fuse(params):
        _wq, _wk, wv, _bq, _bk, bv, wo, bo = params
        # (x @ wv.T + bv) @ wo.T + bo == x @ (wo @ wv).T + (wo @ bv + bo)
        w = (wv.astype(jnp.float32).T @ wo.astype(jnp.float32).T)
        b = (bv.astype(jnp.float32) @ wo.astype(jnp.float32).T
             + bo.astype(jnp.float32))
        return w.astype(param_dtype), b.reshape(1, -1).astype(jnp.float32)

    w_s2i, b_s2i = fuse(params_s2i)   # attn_seq <- cls_img
    w_i2s, b_i2s = fuse(params_i2s)   # attn_img <- cls_seq
    return w_s2i, b_s2i, w_i2s, b_i2s


# --------------------------------------------------------------------------
# Wrapper: single pallas_call, batch grid, VMEM-resident weights.
# --------------------------------------------------------------------------
def bidirectional_cross_attention(cls_seq, cls_img, fused_params, *,
                                  block_b=512):
    w_s2i, b_s2i, w_i2s, b_i2s = fused_params
    B, dim_seq = cls_seq.shape
    Bi, dim_img = cls_img.shape
    assert B == Bi

    # Batch tile: big enough to amortize per-step overhead (~0.35 us) and
    # enable pipelining, small enough that double-buffered tiles stay far
    # below the scoped VMEM limit on every generation (v5e 16 MiB default,
    # v7x 64 MiB physical).  TB == B (any B) or a multiple of 8 are both
    # legal block shapes; partial tail tiles are fine (rows are independent).
    tb = B if B <= block_b else block_b
    grid = (pl.cdiv(B, tb),)

    act_bytes = cls_seq.dtype.itemsize
    w_bytes = w_s2i.dtype.itemsize
    flops = 4 * B * dim_seq * dim_img  # two (B, K) x (K, N) matmuls
    bytes_accessed = (
        B * (dim_seq + dim_img) * act_bytes            # activations in
        + 2 * dim_seq * dim_img * w_bytes              # fused weights
        + 4 * (dim_seq + dim_img)                      # f32 biases
        + B * (dim_seq + dim_img) * act_bytes          # outputs
    )

    out_seq, out_img = pl.pallas_call(
        bidir_kernel,
        grid=grid,
        in_specs=[
            pl.BlockSpec((tb, dim_seq), lambda i: (i, 0)),        # cls_seq tile
            pl.BlockSpec((tb, dim_img), lambda i: (i, 0)),        # cls_img tile
            pl.BlockSpec((dim_img, dim_seq), lambda i: (0, 0)),   # w_s2i (resident)
            pl.BlockSpec((1, dim_seq), lambda i: (0, 0)),         # b_s2i (resident)
            pl.BlockSpec((dim_seq, dim_img), lambda i: (0, 0)),   # w_i2s (resident)
            pl.BlockSpec((1, dim_img), lambda i: (0, 0)),         # b_i2s (resident)
        ],
        out_specs=[
            pl.BlockSpec((tb, dim_seq), lambda i: (i, 0)),
            pl.BlockSpec((tb, dim_img), lambda i: (i, 0)),
        ],
        out_shape=[
            jax.ShapeDtypeStruct((B, dim_seq), cls_seq.dtype),
            jax.ShapeDtypeStruct((B, dim_img), cls_img.dtype),
        ],
        compiler_params=pltpu.CompilerParams(
            dimension_semantics=("parallel",)),   # megacore split on v7x
        cost_estimate=pl.CostEstimate(
            flops=flops, transcendentals=0, bytes_accessed=bytes_accessed),
    )(cls_seq, cls_img, w_s2i, b_s2i, w_i2s, b_i2s)
    return out_seq, out_img


# --------------------------------------------------------------------------
# Synthetic parameters matching torch.nn.MultiheadAttention (kdim != embed_dim
# path: separate q/k/v projection weights, bias=True).
# --------------------------------------------------------------------------
def init_mha_params(key, embed_dim, kdim, num_heads):
    assert embed_dim % num_heads == 0, "embed_dim must be divisible by num_heads"
    ks = jax.random.split(key, 8)
    s = 0.05
    wq = jax.random.normal(ks[0], (embed_dim, embed_dim), jnp.float32) * s
    wk = jax.random.normal(ks[1], (embed_dim, kdim), jnp.float32) * s
    wv = jax.random.normal(ks[2], (embed_dim, kdim), jnp.float32) * s
    bq = jax.random.normal(ks[3], (embed_dim,), jnp.float32) * s
    bk = jax.random.normal(ks[4], (embed_dim,), jnp.float32) * s
    bv = jax.random.normal(ks[5], (embed_dim,), jnp.float32) * s
    wo = jax.random.normal(ks[6], (embed_dim, embed_dim), jnp.float32) * s
    bo = jax.random.normal(ks[7], (embed_dim,), jnp.float32) * s
    return (wq, wk, wv, bq, bk, bv, wo, bo)


# --------------------------------------------------------------------------
# Pure-JAX reference: full torch MHA semantics with seq_len == 1 (including
# q/k projections and softmax), used to validate the fused kernel.
# --------------------------------------------------------------------------
def mha_single_token_ref(xq, xkv, params, num_heads):
    wq, wk, wv, bq, bk, bv, wo, bo = params
    B, E = xq.shape
    Dh = E // num_heads
    q = xq @ wq.T + bq
    k = xkv @ wk.T + bk
    v = xkv @ wv.T + bv
    qh = q.reshape(B, num_heads, Dh)
    kh = k.reshape(B, num_heads, Dh)
    vh = v.reshape(B, num_heads, Dh)
    scores = (qh * kh).sum(-1) / jnp.sqrt(jnp.float32(Dh))    # (B, H)
    w = jax.nn.softmax(scores[..., None], axis=-1)            # key length 1 -> all ones
    attn = (w * vh).reshape(B, E)
    return attn @ wo.T + bo


if __name__ == "__main__":
    B = 8
    dim_seq = 32
    dim_img = 64
    num_heads = 4

    root = jax.random.PRNGKey(0)
    k_seq, k_img, k_p1, k_p2 = jax.random.split(root, 4)

    cls_seq_f32 = jax.random.normal(k_seq, (B, dim_seq), jnp.float32)
    cls_img_f32 = jax.random.normal(k_img, (B, dim_img), jnp.float32)

    # cross_seq_to_img: embed_dim=dim_seq, kdim=vdim=dim_img
    params_s2i = init_mha_params(k_p1, dim_seq, dim_img, num_heads)
    # cross_img_to_seq: embed_dim=dim_img, kdim=vdim=dim_seq
    params_i2s = init_mha_params(k_p2, dim_img, dim_seq, num_heads)

    # One-time fusion (f32) + single cast of the fused weights to bf16.
    fused = make_fused_params(params_s2i, params_i2s, param_dtype=jnp.bfloat16)
    fused = jax.block_until_ready(fused)

    # Upstream layers would produce bf16 CLS tokens directly; cast once here to
    # exercise the reduced-HBM-byte path (bf16 activations + bf16 outputs).
    cls_seq = cls_seq_f32.astype(jnp.bfloat16)
    cls_img = cls_img_f32.astype(jnp.bfloat16)

    attn_seq, attn_img = bidirectional_cross_attention(cls_seq, cls_img, fused)
    jax.block_until_ready((attn_seq, attn_img))

    # Correctness check against the full (q/k/softmax) f32 reference semantics.
    ref_seq = mha_single_token_ref(cls_seq_f32, cls_img_f32, params_s2i, num_heads)
    ref_img = mha_single_token_ref(cls_img_f32, cls_seq_f32, params_i2s, num_heads)
    assert attn_seq.shape == (B, dim_seq) and attn_seq.dtype == jnp.bfloat16
    assert attn_img.shape == (B, dim_img) and attn_img.dtype == jnp.bfloat16
    # bf16 activations/weights -> loose tolerance vs the f32 reference.
    assert bool(jnp.allclose(attn_seq.astype(jnp.float32), ref_seq,
                             atol=3e-2, rtol=3e-2))
    assert bool(jnp.allclose(attn_img.astype(jnp.float32), ref_img,
                             atol=3e-2, rtol=3e-2))

    print("KERNEL_OK")
</pallas_src>

<mosaic_0001>
module attributes {stable_mosaic.version = 11 : i64} {
  func.func @bidir_kernel(%arg0: i32, %arg1: memref<8x32xbf16, #tpu.memory_space<vmem>>, %arg2: memref<8x64xbf16, #tpu.memory_space<vmem>>, %arg3: memref<64x32xbf16, #tpu.memory_space<vmem>>, %arg4: memref<1x32xf32, #tpu.memory_space<vmem>>, %arg5: memref<32x64xbf16, #tpu.memory_space<vmem>>, %arg6: memref<1x64xf32, #tpu.memory_space<vmem>>, %arg7: memref<8x32xbf16, #tpu.memory_space<vmem>>, %arg8: memref<8x64xbf16, #tpu.memory_space<vmem>>) attributes {dimension_semantics = [#tpu.dimension_semantics<parallel>], iteration_bounds = array<i64: 1>, scalar_prefetch = 0 : i64, scratch_operands = 0 : i64, tpu.core_type = #tpu.core_type<tc>, window_params = [{transform_indices = @transform_0, window_bounds = array<i64: 8, 32>}, {transform_indices = @transform_1, window_bounds = array<i64: 8, 64>}, {pipeline_mode = #tpu.pipeline_mode<synchronous>, transform_indices = @transform_2, window_bounds = array<i64: 64, 32>}, {pipeline_mode = #tpu.pipeline_mode<synchronous>, transform_indices = @transform_3, window_bounds = array<i64: 1, 32>}, {pipeline_mode = #tpu.pipeline_mode<synchronous>, transform_indices = @transform_4, window_bounds = array<i64: 32, 64>}, {pipeline_mode = #tpu.pipeline_mode<synchronous>, transform_indices = @transform_5, window_bounds = array<i64: 1, 64>}, {transform_indices = @transform_6, window_bounds = array<i64: 8, 32>}, {transform_indices = @transform_7, window_bounds = array<i64: 8, 64>}]} {
    %c0 = arith.constant 0 : index
    %c0_0 = arith.constant 0 : index
    %0 = vector.load %arg2[%c0, %c0_0] : memref<8x64xbf16, #tpu.memory_space<vmem>>, vector<8x64xbf16>
    %c0_1 = arith.constant 0 : index
    %c0_2 = arith.constant 0 : index
    %1 = vector.load %arg3[%c0_1, %c0_2] : memref<64x32xbf16, #tpu.memory_space<vmem>>, vector<64x32xbf16>
    %cst = arith.constant dense<0.000000e+00> : vector<8x32xf32>
    %2 = tpu.matmul %0, %1, %cst {dimension_numbers = #tpu.dot_dimension_numbers<[1], [0], [0], [1], [0, 0, 1, 1], [], []>} : vector<8x64xbf16>, vector<64x32xbf16>, vector<8x32xf32> -> vector<8x32xf32>
    %c0_3 = arith.constant 0 : index
    %c0_4 = arith.constant 0 : index
    %3 = vector.load %arg4[%c0_3, %c0_4] : memref<1x32xf32, #tpu.memory_space<vmem>>, vector<1x32xf32>
    %4 = vector.broadcast %3 : vector<1x32xf32> to vector<8x32xf32>
    %5 = arith.addf %2, %4 : vector<8x32xf32>
    %6 = arith.truncf %5 : vector<8x32xf32> to vector<8x32xbf16>
    %c0_5 = arith.constant 0 : index
    %c0_6 = arith.constant 0 : index
    %7 = vector.load %arg7[%c0_5, %c0_6] : memref<8x32xbf16, #tpu.memory_space<vmem>>, vector<8x32xbf16>
    tpu.vector_store %arg7[%c0_5, %c0_6], %6 {strides = array<i32>} : memref<8x32xbf16, #tpu.memory_space<vmem>>, vector<8x32xbf16>,
    %c0_7 = arith.constant 0 : index
    %c0_8 = arith.constant 0 : index
    %8 = vector.load %arg1[%c0_7, %c0_8] : memref<8x32xbf16, #tpu.memory_space<vmem>>, vector<8x32xbf16>
    %c0_9 = arith.constant 0 : index
    %c0_10 = arith.constant 0 : index
    %9 = vector.load %arg5[%c0_9, %c0_10] : memref<32x64xbf16, #tpu.memory_space<vmem>>, vector<32x64xbf16>
    %cst_11 = arith.constant dense<0.000000e+00> : vector<8x64xf32>
    %10 = tpu.matmul %8, %9, %cst_11 {dimension_numbers = #tpu.dot_dimension_numbers<[1], [0], [0], [1], [0, 0, 1, 1], [], []>} : vector<8x32xbf16>, vector<32x64xbf16>, vector<8x64xf32> -> vector<8x64xf32>
    %c0_12 = arith.constant 0 : index
    %c0_13 = arith.constant 0 : index
    %11 = vector.load %arg6[%c0_12, %c0_13] : memref<1x64xf32, #tpu.memory_space<vmem>>, vector<1x64xf32>
    %12 = vector.broadcast %11 : vector<1x64xf32> to vector<8x64xf32>
    %13 = arith.addf %10, %12 : vector<8x64xf32>
    %14 = arith.truncf %13 : vector<8x64xf32> to vector<8x64xbf16>
    %c0_14 = arith.constant 0 : index
    %c0_15 = arith.constant 0 : index
    %15 = vector.load %arg8[%c0_14, %c0_15] : memref<8x64xbf16, #tpu.memory_space<vmem>>, vector<8x64xbf16>
    tpu.vector_store %arg8[%c0_14, %c0_15], %14 {strides = array<i32>} : memref<8x64xbf16, #tpu.memory_space<vmem>>, vector<8x64xbf16>,
    return
  }
  func.func @transform_0(%arg0: i32) -> (i32, i32) {
    %c0_i32 = arith.constant 0 : i32
    %c0_i32_0 = arith.constant 0 : i32
    return %arg0, %c0_i32 : i32, i32
  }
  func.func @transform_1(%arg0: i32) -> (i32, i32) {
    %c0_i32 = arith.constant 0 : i32
    %c0_i32_0 = arith.constant 0 : i32
    return %arg0, %c0_i32 : i32, i32
  }
  func.func @transform_2(%arg0: i32) -> (i32, i32) {
    %c0_i32 = arith.constant 0 : i32
    %c0_i32_0 = arith.constant 0 : i32
    %c0_i32_1 = arith.constant 0 : i32
    return %c0_i32, %c0_i32_0 : i32, i32
  }
  func.func @transform_3(%arg0: i32) -> (i32, i32) {
    %c0_i32 = arith.constant 0 : i32
    %c0_i32_0 = arith.constant 0 : i32
    %c0_i32_1 = arith.constant 0 : i32
    return %c0_i32, %c0_i32_0 : i32, i32
  }
  func.func @transform_4(%arg0: i32) -> (i32, i32) {
    %c0_i32 = arith.constant 0 : i32
    %c0_i32_0 = arith.constant 0 : i32
    %c0_i32_1 = arith.constant 0 : i32
    return %c0_i32, %c0_i32_0 : i32, i32
  }
  func.func @transform_5(%arg0: i32) -> (i32, i32) {
    %c0_i32 = arith.constant 0 : i32
    %c0_i32_0 = arith.constant 0 : i32
    %c0_i32_1 = arith.constant 0 : i32
    return %c0_i32, %c0_i32_0 : i32, i32
  }
  func.func @transform_6(%arg0: i32) -> (i32, i32) {
    %c0_i32 = arith.constant 0 : i32
    %c0_i32_0 = arith.constant 0 : i32
    return %arg0, %c0_i32 : i32, i32
  }
  func.func @transform_7(%arg0: i32) -> (i32, i32) {
    %c0_i32 = arith.constant 0 : i32
    %c0_i32_0 = arith.constant 0 : i32
    return %arg0, %c0_i32 : i32, i32
  }
}

</mosaic_0001>

<llo_original>
// kernel: tpu_custom_call.1
$region0: #{tpu_custom_call.1}
  #allocation0 [shape = 'u32[]', space=smem, size = 0x4, offset = 0x4, fixed_abs, tag = 'smem constant byte address 0x4 - core index']
  #allocation1 [shape = 'u32[144,128]{1,0:T(1,128)}', space=vmem, size = 0x12000, scoped, tag = 'internal scratch']
  %s0 = inlined_call_operand.vmem [shape: bf16[8,32], index: 0, kind: input, shape index: {}]
  %s1 = inlined_call_operand.vmem [shape: bf16[8,64], index: 1, kind: input, shape index: {}]
  %s2 = inlined_call_operand.vmem [shape: bf16[64,32], index: 2, kind: input, shape index: {}]
  %s3 = inlined_call_operand.vmem [shape: f32[1,32], index: 3, kind: input, shape index: {}]
  %s4 = inlined_call_operand.vmem [shape: bf16[32,64], index: 4, kind: input, shape index: {}]
  %s5 = inlined_call_operand.vmem [shape: f32[1,64], index: 5, kind: input, shape index: {}]
  %s6 = inlined_call_operand.hbm [shape: bf16[8,32], index: 6, kind: output, shape index: {0}]
  %s7 = inlined_call_operand.hbm [shape: bf16[8,64], index: 7, kind: output, shape index: {1}]
  %8 = xla_tuple %s6, %s7
  %s9 = sld [smem:[#allocation0]]
  $region42: #{tpu_custom_call.1} parent=0
    _
  %s11 = ssub.s32 1, %s9
  %s12 = scalar_select 0, %s11, %s9
  $region1: #{tpu_custom_call.1} parent=0
    #allocation2 [shape = 'u8[2048]{0}', space=vmem, size = 0x800, scoped, tag = 'output window, operand 0, single buffered']
    #allocation3 [shape = 's32[1]{0}', space=sflag, size = 0x4, scoped, tag = 'scoped memory for tpu_custom_call.1']
    #allocation4 [shape = 'u8[2048]{0}', space=vmem, size = 0x800, scoped, tag = 'output window, operand 1, single buffered']
    #allocation5 [shape = 's32[1]{0}', space=sflag, size = 0x4, scoped, tag = 'scoped memory for tpu_custom_call.1']
    %13 = vsyncpa [#allocation3], 0
    %14 = vsyncpa [#allocation5], 0
    // Predicated region
    $region2: #{tpu_custom_call.1} parent=1 // pred_check
      _
    $region3: #{tpu_custom_call.1} parent=1 // pred_check_branch
      %16 = sbr.rel (0) target = $region5
    $region4: #{tpu_custom_call.1} parent=1 // pred_region
      _
    $region5: #{tpu_custom_call.1} parent=1 // pred_fallthru
      _
    // Predicated region
    $region6: #{tpu_custom_call.1} parent=1 // pred_check
      _
    $region7: #{tpu_custom_call.1} parent=1 // pred_check_branch
      %18 = sbr.rel (0) target = $region9
    $region8: #{tpu_custom_call.1} parent=1 // pred_region
      _
    $region9: #{tpu_custom_call.1} parent=1 // pred_fallthru
      _
    // Predicated region
    $region10: #{tpu_custom_call.1} parent=1 // pred_check
      _
    $region11: #{tpu_custom_call.1} parent=1 // pred_check_branch
      %20 = sbr.rel (0) target = $region13
    $region12: #{tpu_custom_call.1} parent=1 // pred_region
      _
    $region13: #{tpu_custom_call.1} parent=1 // pred_fallthru
      _
    // Predicated region
    $region14: #{tpu_custom_call.1} parent=1 // pred_check
      _
    $region15: #{tpu_custom_call.1} parent=1 // pred_check_branch
      %22 = sbr.rel (0) target = $region17
    $region16: #{tpu_custom_call.1} parent=1 // pred_region
      _
    $region17: #{tpu_custom_call.1} parent=1 // pred_fallthru
      _
    // Predicated region
    $region18: #{tpu_custom_call.1} parent=1 // pred_check
      _
    $region19: #{tpu_custom_call.1} parent=1 // pred_check_branch
      %24 = sbr.rel (0) target = $region21
    $region20: #{tpu_custom_call.1} parent=1 // pred_region
      _
    $region21: #{tpu_custom_call.1} parent=1 // pred_fallthru
      _
    // Predicated region
    $region22: #{tpu_custom_call.1} parent=1 // pred_check
      _
    $region23: #{tpu_custom_call.1} parent=1 // pred_check_branch
      %26 = sbr.rel (0) target = $region25
    $region24: #{tpu_custom_call.1} parent=1 // pred_region
      _
    $region25: #{tpu_custom_call.1} parent=1 // pred_fallthru
      _
    %v28 = vld [vmem:[%s1] sm:$0xf]
    %v29 = vld [vmem:[%s2] sm:$0xf]
    %v30 = vld [vmem:[%s2 + $0x4] sm:$0xf]
    %v31 = vld [vmem:[%s2 + $0x8] sm:$0xf]
    %v32 = vld [vmem:[%s2 + $0xc] sm:$0xf]
    %v33 = vld [vmem:[%s2 + $0x10] sm:$0xf]
    %v34 = vld [vmem:[%s2 + $0x14] sm:$0xf]
    %v35 = vld [vmem:[%s2 + $0x18] sm:$0xf]
    %v36 = vld [vmem:[%s2 + $0x1c] sm:$0xf]
    %v37 = vld [vmem:[%s3] sm:$0x1]
    %v39 = vlaneseq
    %v40 = vshrl.u32 %v39, 7
    %v41 = vsub.s32 0, %v40
    %v42 = vrot.slane %v37, %v41
    %v52 = vunpack.c.l.b16 %v29
    %v53 = vunpack.c.l.b16 %v30
    %v54 = vunpack.c.l.b16 %v31
    %v55 = vunpack.c.l.b16 %v32
    %v56 = vunpack.c.l.b16 %v33
    %v57 = vunpack.c.l.b16 %v34
    %v58 = vunpack.c.l.b16 %v35
    %v59 = vunpack.c.l.b16 %v36
    %v60 = vpack.c.b16 %v53, %v52
    %v61 = vpack.c.b16 %v55, %v54
    %v62 = vpack.c.b16 %v57, %v56
    %v63 = vpack.c.b16 %v59, %v58
    %vm68 = vcmask 523264
    %v70 = vsel %vm68, %v28, 0
    %72 = vmatprep.subr.bf16.mxu0 0
    %73 = vmatpush1.bf16.msra.mxu0 %v60
    %74 = vmatprep.subr.bf16.mxu0 0
    %75 = vmatpush1.bf16.msra.mxu0 %v61
    %76 = vmatprep.subr.bf16.mxu0 0
    %77 = vmatpush1.bf16.msra.mxu0 %v62
    %78 = vmatprep.subr.bf16.mxu0 0
    %79 = vmatpush1.bf16.msra.mxu0 %v63
    %80 = vmatprep.subr.bf16.mxu0 0
    %81 = vmatpush1.bf16.msra.mxu0 0
    %82 = vmatprep.subr.bf16.mxu0 0
    %83 = vmatpush1.bf16.msra.mxu0 0
    %84 = vmatprep.subr.bf16.mxu0 0
    %85 = vmatpush1.bf16.msra.mxu0 0
    %86 = vmatprep.subr.bf16.mxu0 0
    %87 = vmatpush1.bf16.msra.mxu0 0
    %88 = vmatprep.subr.bf16.mxu0 0
    %89 = vmatpush1.bf16.msra.mxu0 0
    %90 = vmatprep.subr.bf16.mxu0 0
    %91 = vmatpush1.bf16.msra.mxu0 0
    %92 = vmatprep.subr.bf16.mxu0 0
    %93 = vmatpush1.bf16.msra.mxu0 0
    %94 = vmatprep.subr.bf16.mxu0 0
    %95 = vmatpush1.bf16.msra.mxu0 0
    %96 = vmatprep.subr.bf16.mxu0 0
    %97 = vmatpush1.bf16.msra.mxu0 0
    %98 = vmatprep.subr.bf16.mxu0 0
    %99 = vmatpush1.bf16.msra.mxu0 0
    %100 = vmatprep.subr.bf16.mxu0 0
    %101 = vmatpush1.bf16.msra.mxu0 0
    %102 = vmatprep.subr.bf16.mxu0 0
    %103 = vmatpush1.bf16.msra.mxu0 0
    %104 = vmatprep.mubr.bf16.mxu0 0
    %105 = vmatmul.mubr.bf16.gmra.mrb[0].mxu0 %v70
    %v106 = vpop.f32.mrb[0].mxu0
    %v107 = vadd.f32 %v42, %v106
    %v108 = vpop.f32.mrb[0].mxu0
    %v109 = vpop.f32.mrb[0].mxu0
    %v110 = vpop.f32.mrb[0].mxu0
    %111 = vdwg.mxu0
    %v112 = vpack.c.bf16 %v107, %v107
    %vm113 = vcmask 257024
    %114 = vst.msk [vmem:[#allocation2] sm:$0xf] %vm113, %v112
    %v115 = vld [vmem:[%s0] sm:$0xf]
    %v116 = vld [vmem:[%s4] sm:$0xf]
    %v117 = vld [vmem:[%s4 + $0x4] sm:$0xf]
    %v118 = vld [vmem:[%s4 + $0x8] sm:$0xf]
    %v119 = vld [vmem:[%s4 + $0xc] sm:$0xf]
    %v120 = vld [vmem:[%s5] sm:$0x1]
    %v122 = vlaneseq
    %v123 = vshrl.u32 %v122, 7
    %v124 = vsub.s32 0, %v123
    %v125 = vrot.slane %v120, %v124
    %v131 = vunpack.c.l.b16 %v116
    %v132 = vunpack.c.l.b16 %v117
    %v133 = vunpack.c.l.b16 %v118
    %v134 = vunpack.c.l.b16 %v119
    %v135 = vpack.c.b16 %v132, %v131
    %v136 = vpack.c.b16 %v134, %v133
    %vm139 = vcmask 261120
    %v141 = vsel %vm139, %v115, 0
    %143 = vmatprep.subr.bf16.mxu0 0
    %144 = vmatpush1.bf16.msra.mxu0 %v135
    %145 = vmatprep.subr.bf16.mxu0 0
    %146 = vmatpush1.bf16.msra.mxu0 %v136
    %147 = vmatprep.subr.bf16.mxu0 0
    %148 = vmatpush1.bf16.msra.mxu0 0
    %149 = vmatprep.subr.bf16.mxu0 0
    %150 = vmatpush1.bf16.msra.mxu0 0
    %151 = vmatprep.subr.bf16.mxu0 0
    %152 = vmatpush1.bf16.msra.mxu0 0
    %153 = vmatprep.subr.bf16.mxu0 0
    %154 = vmatpush1.bf16.msra.mxu0 0
    %155 = vmatprep.subr.bf16.mxu0 0
    %156 = vmatpush1.bf16.msra.mxu0 0
    %157 = vmatprep.subr.bf16.mxu0 0
    %158 = vmatpush1.bf16.msra.mxu0 0
    %159 = vmatprep.subr.bf16.mxu0 0
    %160 = vmatpush1.bf16.msra.mxu0 0
    %161 = vmatprep.subr.bf16.mxu0 0
    %162 = vmatpush1.bf16.msra.mxu0 0
    %163 = vmatprep.subr.bf16.mxu0 0
    %164 = vmatpush1.bf16.msra.mxu0 0
    %165 = vmatprep.subr.bf16.mxu0 0
    %166 = vmatpush1.bf16.msra.mxu0 0
    %167 = vmatprep.subr.bf16.mxu0 0
    %168 = vmatpush1.bf16.msra.mxu0 0
    %169 = vmatprep.subr.bf16.mxu0 0
    %170 = vmatpush1.bf16.msra.mxu0 0
    %171 = vmatprep.subr.bf16.mxu0 0
    %172 = vmatpush1.bf16.msra.mxu0 0
    %173 = vmatprep.subr.bf16.mxu0 0
    %174 = vmatpush1.bf16.msra.mxu0 0
    %175 = vmatprep.mubr.bf16.mxu0 0
    %176 = vmatmul.mubr.bf16.gmra.mrb[0].mxu0 %v141
    %v177 = vpop.f32.mrb[0].mxu0
    %v178 = vadd.f32 %v125, %v177
    %v179 = vpop.f32.mrb[0].mxu0
    %v180 = vpop.f32.mrb[0].mxu0
    %v181 = vpop.f32.mrb[0].mxu0
    %182 = vdwg.mxu0
    %v183 = vpack.c.bf16 %v178, %v178
    %vm184 = vcmask 519168
    %185 = vst.msk [vmem:[#allocation4] sm:$0xf] %vm184, %v183
    // Predicated region
    $region26: #{tpu_custom_call.1} parent=1 // pred_check
      _
    $region27: #{tpu_custom_call.1} parent=1 // pred_check_branch
      %187 = sbr.rel (0) target = $region29
    $region28: #{tpu_custom_call.1} parent=1 // pred_region
      %s189 = ssub.s32 64, 64
      %190 = vsyncadd [#allocation3], %s189
      %s192 = sshll.u32 [#allocation2], 4
      %s193 = int_to_ptr.vmem [resolvable:$true] %s192
      %195 = dma.vmem_to_hbm [thread:$0]  %s193, 64, %s6, [#allocation3]
    $region29: #{tpu_custom_call.1} parent=1 // pred_fallthru
      _
    // Predicated region
    $region30: #{tpu_custom_call.1} parent=1 // pred_check
      _
    $region31: #{tpu_custom_call.1} parent=1 // pred_check_branch
      %197 = sbr.rel (0) target = $region33
    $region32: #{tpu_custom_call.1} parent=1 // pred_region
      %s199 = ssub.s32 64, 64
      %200 = vsyncadd [#allocation5], %s199
      %s202 = sshll.u32 [#allocation4], 4
      %s203 = int_to_ptr.vmem [resolvable:$true] %s202
      %205 = dma.vmem_to_hbm [thread:$0]  %s203, 64, %s7, [#allocation5]
    $region33: #{tpu_custom_call.1} parent=1 // pred_fallthru
      _
    // Predicated region
    $region34: #{tpu_custom_call.1} parent=1 // pred_check
      _
    $region35: #{tpu_custom_call.1} parent=1 // pred_check_branch
      %207 = sbr.rel (0) target = $region37
    $region36: #{tpu_custom_call.1} parent=1 // pred_region
      %208 = dma.done [#allocation3], 64
    $region37: #{tpu_custom_call.1} parent=1 // pred_fallthru
      _
    // Predicated region
    $region38: #{tpu_custom_call.1} parent=1 // pred_check
      _
    $region39: #{tpu_custom_call.1} parent=1 // pred_check_branch
      %210 = sbr.rel (0) target = $region41
    $region40: #{tpu_custom_call.1} parent=1 // pred_region
      %211 = dma.done [#allocation5], 64
    $region41: #{tpu_custom_call.1} parent=1 // pred_fallthru
      _
    %212 = vsyncpa [#allocation3], 1
    %213 = vsyncpa [#allocation5], 1

</llo_original>
